<compile_context>
chip_gen: v7x
topology: tpu7x:2x2x1
jax: 0.10.0
libtpu: 0.0.40
codegen_flags: <defaults>
</compile_context>

<pallas_src>
import jax
import jax.numpy as jnp
from jax.experimental import pallas as pl
from jax.experimental.pallas import tpu as pltpu

IN_FEATURES = 2
HIDDEN = 100
HIDDEN_PAD = 128          # zero-padded hidden width (lane/sublane aligned)
OUT = 3
LEAKY_SLOPE = 0.01        # PyTorch nn.LeakyReLU default negative_slope


def _leaky_relu(x):
    return jnp.where(x > 0, x, LEAKY_SLOPE * x)


def _default_elementwise_dtype():
    """bf16 elementwise on chips with a bf16 VALU (v6e/v7x); f32 otherwise."""
    try:
        kind = jax.devices()[0].device_kind.lower()
    except Exception:
        return jnp.float32
    if "v6" in kind or "v7" in kind:
        return jnp.bfloat16
    return jnp.float32


def _make_kernel(ew_dtype):
    def mlp_kernel(xt_ref, w1_ref, b1_ref, w2_ref, b2_ref, w3_ref, o_ref):
        xt = xt_ref[...]                       # (2, TN)   f32, batch on lanes
        w1 = w1_ref[...]                       # (128, 2)  f32 (padded rows 0)

        # Layer 1: Linear(2 -> 128pad) as two broadcast FMAs on the VPU
        # (K=2 is too small to be worth an MXU push/drain). f32 FMA + bias.
        h1 = w1[:, 0:1] * xt[0:1, :] + w1[:, 1:2] * xt[1:2, :] + b1_ref[...]
        # Bulk elementwise in ew_dtype (bf16 on v6e/v7x, f32 on v5e).
        h1 = _leaky_relu(h1.astype(ew_dtype))  # (128, TN); padded rows stay 0

        # Layer 2: Linear(128pad -> 128pad) on the MXU, bf16 operands, f32 acc.
        # W2 is the small grid-constant operand and should be the stationary
        # MXU matrix with this operand order.
        # TODO(synk): confirm with pl.lower_as_mlir that W2 (not the (128,TN)
        # activation) is staged as the stationary operand.
        h2 = jnp.dot(w2_ref[...], h1.astype(jnp.bfloat16),
                     preferred_element_type=jnp.float32)       # (128, TN) f32
        h2 = _leaky_relu(h2.astype(ew_dtype) + b2_ref[...])    # ew_dtype

        # Layer 3: Linear(128pad -> 3), no bias.  Padded weight columns are
        # zero, so no masking of the logits is needed.
        logits = jnp.dot(w3_ref[...], h2.astype(jnp.bfloat16),
                         preferred_element_type=jnp.float32)   # (3, TN) f32

        # Softmax over the 3 classes (sublane axis), f32, EXACT normalization
        # (approx reciprocal previously broke sum-to-1 within 1e-3).
        m = jnp.max(logits, axis=0, keepdims=True)
        e = jnp.exp(logits - m)
        denom = jnp.sum(e, axis=0, keepdims=True)
        o_ref[...] = (e / denom).astype(o_ref.dtype)

    return mlp_kernel


def _pad_params(w1, b1, w2, b2, w3, ew_dtype):
    """PyTorch-layout params (out, in) -> padded kernel-layout params."""
    pad = HIDDEN_PAD - HIDDEN
    w1p = jnp.pad(w1.astype(jnp.float32), ((0, pad), (0, 0)))             # (128, 2)
    b1p = jnp.pad(b1.astype(jnp.float32), (0, pad)).reshape(HIDDEN_PAD, 1)
    w2p = jnp.pad(w2.astype(jnp.float32), ((0, pad), (0, pad))).astype(jnp.bfloat16)
    b2p = jnp.pad(b2.astype(jnp.float32), (0, pad)).reshape(HIDDEN_PAD, 1).astype(ew_dtype)
    w3p = jnp.pad(w3.astype(jnp.float32), ((0, 0), (0, pad))).astype(jnp.bfloat16)
    return w1p, b1p, w2p, b2p, w3p


def _pick_tile(n, block_n):
    """Pick (tile_n, padded_n): lane-aligned, big, and >=2 grid steps when possible."""
    if n < 2 * 128:
        # Single full-array block (block == full dims -> no alignment rule;
        # per-step overhead dominates at tiny N anyway).
        return n, n
    block_n = max(128, (block_n // 128) * 128)
    n_lanes = pl.cdiv(n, 128) * 128
    # Cap the tile at half the (128-rounded) batch so the grid has >= 2 steps
    # and both v7x TensorCores get work; keep it a multiple of 128.
    tn = min(block_n, max(128, (n_lanes // 2 // 128) * 128))
    n_pad = pl.cdiv(n, tn) * tn
    return tn, n_pad


def mlp_forward_cols(xt, w1, b1, w2, b2, w3, *, block_n=4096,
                     elementwise_dtype=None):
    """Lane-dense entry point: xt is (2, N) f32 (batch on lanes); returns
    softmax probs as (3, N).  Use this to avoid wrapper transpose HBM traffic."""
    if elementwise_dtype is None:
        elementwise_dtype = _default_elementwise_dtype()
    n = xt.shape[1]
    w1p, b1p, w2p, b2p, w3p = _pad_params(w1, b1, w2, b2, w3, elementwise_dtype)

    tn, n_pad = _pick_tile(n, block_n)
    xt = xt.astype(jnp.float32)
    if n_pad != n:
        xt = jnp.pad(xt, ((0, 0), (0, n_pad - n)))

    grid = (n_pad // tn,)
    const = lambda shape: pl.BlockSpec(shape, lambda i: (0, 0))  # VMEM-resident

    out_t = pl.pallas_call(
        _make_kernel(elementwise_dtype),
        out_shape=jax.ShapeDtypeStruct((OUT, n_pad), jnp.float32),
        grid=grid,
        in_specs=[
            pl.BlockSpec((IN_FEATURES, tn), lambda i: (0, i)),   # x tile
            const(w1p.shape),
            const(b1p.shape),
            const(w2p.shape),
            const(b2p.shape),
            const(w3p.shape),
        ],
        out_specs=pl.BlockSpec((OUT, tn), lambda i: (0, i)),
        compiler_params=pltpu.CompilerParams(
            dimension_semantics=("parallel",),          # megacore on v7x
            vmem_limit_bytes=32 * 1024 * 1024,          # headroom on 64MiB v7x
        ),
    )(xt, w1p, b1p, w2p, b2p, w3p)

    return out_t[:, :n] if n_pad != n else out_t


def mlp_forward(x, w1, b1, w2, b2, w3, *, block_n=4096, elementwise_dtype=None):
    """Convenience wrapper. x: (N, 2) f32; params in PyTorch layout:
    w1 (100,2), b1 (100,), w2 (100,100), b2 (100,), w3 (3,100).
    Returns softmax probs (N, 3)."""
    out_t = mlp_forward_cols(x.astype(jnp.float32).T, w1, b1, w2, b2, w3,
                             block_n=block_n, elementwise_dtype=elementwise_dtype)
    # The module's .squeeze(-1) is a no-op (last dim = 3).
    return out_t.T


def init_params(key):
    """Deterministic init mimicking PyTorch Linear default U(-1/sqrt(fan_in), +)."""
    k1, k2, k3, k4, k5 = jax.random.split(key, 5)

    def uni(k, shape, fan_in):
        bound = 1.0 / jnp.sqrt(jnp.float32(fan_in))
        return jax.random.uniform(k, shape, jnp.float32, -bound, bound)

    w1 = uni(k1, (HIDDEN, IN_FEATURES), IN_FEATURES)
    b1 = uni(k2, (HIDDEN,), IN_FEATURES)
    w2 = uni(k3, (HIDDEN, HIDDEN), HIDDEN)
    b2 = uni(k4, (HIDDEN,), HIDDEN)
    w3 = uni(k5, (OUT, HIDDEN), HIDDEN)   # bias=False
    return w1, b1, w2, b2, w3


def reference_forward(x, w1, b1, w2, b2, w3, *, ew_dtype=jnp.float32,
                      match_mxu=True):
    """Pure-JAX reference. With match_mxu/ew_dtype it mirrors the kernel's
    dtype choices; with (f32, False) it is the exact PyTorch f32 forward."""
    x = x.astype(jnp.float32)
    h1 = x @ w1.T.astype(jnp.float32) + b1
    h1 = _leaky_relu(h1.astype(ew_dtype))
    if match_mxu:
        h2 = jnp.dot(h1.astype(jnp.bfloat16), w2.T.astype(jnp.bfloat16),
                     preferred_element_type=jnp.float32)
    else:
        h2 = h1.astype(jnp.float32) @ w2.T
    h2 = _leaky_relu(h2.astype(ew_dtype) + b2.astype(ew_dtype))
    if match_mxu:
        logits = jnp.dot(h2.astype(jnp.bfloat16), w3.T.astype(jnp.bfloat16),
                         preferred_element_type=jnp.float32)
    else:
        logits = h2.astype(jnp.float32) @ w3.T
    return jax.nn.softmax(logits.astype(jnp.float32), axis=-1)


if __name__ == "__main__":
    key = jax.random.PRNGKey(0)
    kx, kp = jax.random.split(key)

    params = init_params(kp)
    ew = _default_elementwise_dtype()

    # Small batch: single full-array block path.
    batch = 8
    x = jax.random.normal(kx, (batch, IN_FEATURES), jnp.float32)
    out = jax.block_until_ready(mlp_forward(x, *params))
    assert out.shape == (batch, OUT)
    ref_match = reference_forward(x, *params, ew_dtype=ew, match_mxu=True)
    ref_f32 = reference_forward(x, *params, ew_dtype=jnp.float32, match_mxu=False)
    assert jnp.allclose(out, ref_match, atol=5e-3, rtol=0), float(
        jnp.max(jnp.abs(out - ref_match)))
    assert jnp.allclose(out, ref_f32, atol=3e-2, rtol=0)
    # Exact divide -> rows sum to 1 within f32 precision.
    assert jnp.allclose(jnp.sum(out, axis=-1), 1.0, atol=1e-5)

    # Non-aligned batch: exercises the gridded (>=2 steps) + padded pipeline.
    batch2 = 300
    x2 = jax.random.normal(kx, (batch2, IN_FEATURES), jnp.float32)
    out2 = jax.block_until_ready(mlp_forward(x2, *params, block_n=128))
    assert out2.shape == (batch2, OUT)
    ref2 = reference_forward(x2, *params, ew_dtype=ew, match_mxu=True)
    assert jnp.allclose(out2, ref2, atol=5e-3, rtol=0), float(
        jnp.max(jnp.abs(out2 - ref2)))
    assert jnp.allclose(jnp.sum(out2, axis=-1), 1.0, atol=1e-5)

    # f32-elementwise path (the v5e default) explicitly.
    out3 = jax.block_until_ready(
        mlp_forward(x2, *params, elementwise_dtype=jnp.float32))
    ref3 = reference_forward(x2, *params, ew_dtype=jnp.float32, match_mxu=True)
    assert jnp.allclose(out3, ref3, atol=5e-3, rtol=0)

    # Lane-dense entry point (no wrapper transposes).
    out_cols = jax.block_until_ready(
        mlp_forward_cols(x2.astype(jnp.float32).T, *params))
    assert out_cols.shape == (OUT, batch2)
    assert jnp.allclose(out_cols.T, ref2, atol=5e-3, rtol=0)

    print("KERNEL_OK")
</pallas_src>

<mosaic_0001>
module attributes {stable_mosaic.version = 11 : i64} {
  func.func @mlp_kernel(%arg0: i32, %arg1: memref<2x8xf32, #tpu.memory_space<vmem>>, %arg2: memref<128x2xf32, #tpu.memory_space<vmem>>, %arg3: memref<128x1xf32, #tpu.memory_space<vmem>>, %arg4: memref<128x128xbf16, #tpu.memory_space<vmem>>, %arg5: memref<128x1xf32, #tpu.memory_space<vmem>>, %arg6: memref<3x128xbf16, #tpu.memory_space<vmem>>, %arg7: memref<3x8xf32, #tpu.memory_space<vmem>>) attributes {dimension_semantics = [#tpu.dimension_semantics<parallel>], iteration_bounds = array<i64: 1>, scalar_prefetch = 0 : i64, scratch_operands = 0 : i64, tpu.core_type = #tpu.core_type<tc>, window_params = [{transform_indices = @transform_0, window_bounds = array<i64: 2, 8>}, {pipeline_mode = #tpu.pipeline_mode<synchronous>, transform_indices = @transform_1, window_bounds = array<i64: 128, 2>}, {pipeline_mode = #tpu.pipeline_mode<synchronous>, transform_indices = @transform_2, window_bounds = array<i64: 128, 1>}, {pipeline_mode = #tpu.pipeline_mode<synchronous>, transform_indices = @transform_3, window_bounds = array<i64: 128, 128>}, {pipeline_mode = #tpu.pipeline_mode<synchronous>, transform_indices = @transform_4, window_bounds = array<i64: 128, 1>}, {pipeline_mode = #tpu.pipeline_mode<synchronous>, transform_indices = @transform_5, window_bounds = array<i64: 3, 128>}, {transform_indices = @transform_6, window_bounds = array<i64: 3, 8>}]} {
    %c0 = arith.constant 0 : index
    %c0_0 = arith.constant 0 : index
    %0 = vector.load %arg1[%c0, %c0_0] : memref<2x8xf32, #tpu.memory_space<vmem>>, vector<2x8xf32>
    %c0_1 = arith.constant 0 : index
    %c0_2 = arith.constant 0 : index
    %1 = vector.load %arg2[%c0_1, %c0_2] : memref<128x2xf32, #tpu.memory_space<vmem>>, vector<128x2xf32>
    %2 = vector.extract_strided_slice %1 {offsets = [0, 0], sizes = [128, 1], strides = [1, 1]} : vector<128x2xf32> to vector<128x1xf32>
    %3 = vector.extract_strided_slice %0 {offsets = [0, 0], sizes = [1, 8], strides = [1, 1]} : vector<2x8xf32> to vector<1x8xf32>
    %4 = vector.broadcast %2 : vector<128x1xf32> to vector<128x8xf32>
    %5 = vector.broadcast %3 : vector<1x8xf32> to vector<128x8xf32>
    %6 = arith.mulf %4, %5 : vector<128x8xf32>
    %7 = vector.extract_strided_slice %1 {offsets = [0, 1], sizes = [128, 1], strides = [1, 1]} : vector<128x2xf32> to vector<128x1xf32>
    %8 = vector.extract_strided_slice %0 {offsets = [1, 0], sizes = [1, 8], strides = [1, 1]} : vector<2x8xf32> to vector<1x8xf32>
    %9 = vector.broadcast %7 : vector<128x1xf32> to vector<128x8xf32>
    %10 = vector.broadcast %8 : vector<1x8xf32> to vector<128x8xf32>
    %11 = arith.mulf %9, %10 : vector<128x8xf32>
    %12 = arith.addf %6, %11 : vector<128x8xf32>
    %c0_3 = arith.constant 0 : index
    %c0_4 = arith.constant 0 : index
    %13 = vector.load %arg3[%c0_3, %c0_4] : memref<128x1xf32, #tpu.memory_space<vmem>>, vector<128x1xf32>
    %14 = vector.broadcast %13 : vector<128x1xf32> to vector<128x8xf32>
    %15 = arith.addf %12, %14 : vector<128x8xf32>
    %cst = arith.constant 0.000000e+00 : f32
    %16 = vector.broadcast %cst : f32 to vector<128x8xf32>
    %17 = arith.cmpf ogt, %15, %16 : vector<128x8xf32>
    %cst_5 = arith.constant 0.00999999977 : f32
    %18 = vector.broadcast %cst_5 : f32 to vector<128x8xf32>
    %19 = arith.mulf %18, %15 : vector<128x8xf32>
    %20 = arith.select %17, %15, %19 : vector<128x8xi1>, vector<128x8xf32>
    %c0_6 = arith.constant 0 : index
    %c0_7 = arith.constant 0 : index
    %21 = vector.load %arg4[%c0_6, %c0_7] : memref<128x128xbf16, #tpu.memory_space<vmem>>, vector<128x128xbf16>
    %22 = arith.truncf %20 : vector<128x8xf32> to vector<128x8xbf16>
    %cst_8 = arith.constant dense<0.000000e+00> : vector<128x8xf32>
    %23 = tpu.matmul %21, %22, %cst_8 {dimension_numbers = #tpu.dot_dimension_numbers<[1], [0], [0], [1], [0, 0, 1, 1], [], []>} : vector<128x128xbf16>, vector<128x8xbf16>, vector<128x8xf32> -> vector<128x8xf32>
    %c0_9 = arith.constant 0 : index
    %c0_10 = arith.constant 0 : index
    %24 = vector.load %arg5[%c0_9, %c0_10] : memref<128x1xf32, #tpu.memory_space<vmem>>, vector<128x1xf32>
    %25 = vector.broadcast %24 : vector<128x1xf32> to vector<128x8xf32>
    %26 = arith.addf %23, %25 : vector<128x8xf32>
    %cst_11 = arith.constant 0.000000e+00 : f32
    %27 = vector.broadcast %cst_11 : f32 to vector<128x8xf32>
    %28 = arith.cmpf ogt, %26, %27 : vector<128x8xf32>
    %cst_12 = arith.constant 0.00999999977 : f32
    %29 = vector.broadcast %cst_12 : f32 to vector<128x8xf32>
    %30 = arith.mulf %29, %26 : vector<128x8xf32>
    %31 = arith.select %28, %26, %30 : vector<128x8xi1>, vector<128x8xf32>
    %c0_13 = arith.constant 0 : index
    %c0_14 = arith.constant 0 : index
    %32 = vector.load %arg6[%c0_13, %c0_14] : memref<3x128xbf16, #tpu.memory_space<vmem>>, vector<3x128xbf16>
    %33 = arith.truncf %31 : vector<128x8xf32> to vector<128x8xbf16>
    %cst_15 = arith.constant dense<0.000000e+00> : vector<3x8xf32>
    %34 = tpu.matmul %32, %33, %cst_15 {dimension_numbers = #tpu.dot_dimension_numbers<[1], [0], [0], [1], [0, 0, 1, 1], [], []>} : vector<3x128xbf16>, vector<128x8xbf16>, vector<3x8xf32> -> vector<3x8xf32>
    %cst_16 = arith.constant dense<0xFF800000> : vector<8xf32>
    %35 = vector.multi_reduction <maximumf>, %34, %cst_16 [0] : vector<3x8xf32> to vector<8xf32>
    %36 = vector.shape_cast %35 : vector<8xf32> to vector<1x8xf32>
    %37 = vector.broadcast %36 : vector<1x8xf32> to vector<3x8xf32>
    %38 = arith.subf %34, %37 : vector<3x8xf32>
    %39 = math.exp %38 : vector<3x8xf32>
    %cst_17 = arith.constant dense<0.000000e+00> : vector<8xf32>
    %40 = vector.multi_reduction <add>, %39, %cst_17 [0] : vector<3x8xf32> to vector<8xf32>
    %41 = vector.shape_cast %40 : vector<8xf32> to vector<1x8xf32>
    %42 = vector.broadcast %41 : vector<1x8xf32> to vector<3x8xf32>
    %43 = arith.divf %39, %42 : vector<3x8xf32>
    %c0_18 = arith.constant 0 : index
    %c0_19 = arith.constant 0 : index
    %44 = vector.load %arg7[%c0_18, %c0_19] : memref<3x8xf32, #tpu.memory_space<vmem>>, vector<3x8xf32>
    tpu.vector_store %arg7[%c0_18, %c0_19], %43 {strides = array<i32>} : memref<3x8xf32, #tpu.memory_space<vmem>>, vector<3x8xf32>,
    return
  }
  func.func @transform_0(%arg0: i32) -> (i32, i32) {
    %c0_i32 = arith.constant 0 : i32
    %c0_i32_0 = arith.constant 0 : i32
    return %c0_i32, %arg0 : i32, i32
  }
  func.func @transform_1(%arg0: i32) -> (i32, i32) {
    %c0_i32 = arith.constant 0 : i32
    %c0_i32_0 = arith.constant 0 : i32
    %c0_i32_1 = arith.constant 0 : i32
    return %c0_i32, %c0_i32_0 : i32, i32
  }
  func.func @transform_2(%arg0: i32) -> (i32, i32) {
    %c0_i32 = arith.constant 0 : i32
    %c0_i32_0 = arith.constant 0 : i32
    %c0_i32_1 = arith.constant 0 : i32
    return %c0_i32, %c0_i32_0 : i32, i32
  }
  func.func @transform_3(%arg0: i32) -> (i32, i32) {
    %c0_i32 = arith.constant 0 : i32
    %c0_i32_0 = arith.constant 0 : i32
    %c0_i32_1 = arith.constant 0 : i32
    return %c0_i32, %c0_i32_0 : i32, i32
  }
  func.func @transform_4(%arg0: i32) -> (i32, i32) {
    %c0_i32 = arith.constant 0 : i32
    %c0_i32_0 = arith.constant 0 : i32
    %c0_i32_1 = arith.constant 0 : i32
    return %c0_i32, %c0_i32_0 : i32, i32
  }
  func.func @transform_5(%arg0: i32) -> (i32, i32) {
    %c0_i32 = arith.constant 0 : i32
    %c0_i32_0 = arith.constant 0 : i32
    %c0_i32_1 = arith.constant 0 : i32
    return %c0_i32, %c0_i32_0 : i32, i32
  }
  func.func @transform_6(%arg0: i32) -> (i32, i32) {
    %c0_i32 = arith.constant 0 : i32
    %c0_i32_0 = arith.constant 0 : i32
    return %c0_i32, %arg0 : i32, i32
  }
}

</mosaic_0001>

<llo_original>
// kernel: tpu_custom_call.1
$region0: #{tpu_custom_call.1}
  #allocation0 [shape = 'u32[]', space=smem, size = 0x4, offset = 0x4, fixed_abs, tag = 'smem constant byte address 0x4 - core index']
  #allocation1 [shape = 'u32[144,128]{1,0:T(1,128)}', space=vmem, size = 0x12000, scoped, tag = 'internal scratch']
  %s0 = inlined_call_operand.vmem [shape: f32[2,8], index: 0, kind: input, shape index: {}]
  %s1 = inlined_call_operand.vmem [shape: f32[128,2], index: 1, kind: input, shape index: {}]
  %s2 = inlined_call_operand.vmem [shape: f32[128,1], index: 2, kind: input, shape index: {}]
  %s3 = inlined_call_operand.vmem [shape: bf16[128,128], index: 3, kind: input, shape index: {}]
  %s4 = inlined_call_operand.vmem [shape: f32[128,1], index: 4, kind: input, shape index: {}]
  %s5 = inlined_call_operand.vmem [shape: bf16[3,128], index: 5, kind: input, shape index: {}]
  %s6 = inlined_call_operand.hbm [shape: f32[3,8], index: 6, kind: output, shape index: {}]
  %s7 = sld [smem:[#allocation0]]
  $region34: #{tpu_custom_call.1} parent=0
    _
  %s9 = ssub.s32 1, %s7
  %s10 = scalar_select 0, %s9, %s7
  $region1: #{tpu_custom_call.1} parent=0
    #allocation2 [shape = 'u8[2048]{0}', space=vmem, size = 0x800, scoped, tag = 'output window, operand 0, single buffered']
    #allocation3 [shape = 's32[1]{0}', space=sflag, size = 0x4, scoped, tag = 'scoped memory for tpu_custom_call.1']
    %11 = vsyncpa [#allocation3], 0
    // Predicated region
    $region2: #{tpu_custom_call.1} parent=1 // pred_check
      _
    $region3: #{tpu_custom_call.1} parent=1 // pred_check_branch
      %13 = sbr.rel (0) target = $region5
    $region4: #{tpu_custom_call.1} parent=1 // pred_region
      _
    $region5: #{tpu_custom_call.1} parent=1 // pred_fallthru
      _
    // Predicated region
    $region6: #{tpu_custom_call.1} parent=1 // pred_check
      _
    $region7: #{tpu_custom_call.1} parent=1 // pred_check_branch
      %15 = sbr.rel (0) target = $region9
    $region8: #{tpu_custom_call.1} parent=1 // pred_region
      _
    $region9: #{tpu_custom_call.1} parent=1 // pred_fallthru
      _
    // Predicated region
    $region10: #{tpu_custom_call.1} parent=1 // pred_check
      _
    $region11: #{tpu_custom_call.1} parent=1 // pred_check_branch
      %17 = sbr.rel (0) target = $region13
    $region12: #{tpu_custom_call.1} parent=1 // pred_region
      _
    $region13: #{tpu_custom_call.1} parent=1 // pred_fallthru
      _
    // Predicated region
    $region14: #{tpu_custom_call.1} parent=1 // pred_check
      _
    $region15: #{tpu_custom_call.1} parent=1 // pred_check_branch
      %19 = sbr.rel (0) target = $region17
    $region16: #{tpu_custom_call.1} parent=1 // pred_region
      _
    $region17: #{tpu_custom_call.1} parent=1 // pred_fallthru
      _
    // Predicated region
    $region18: #{tpu_custom_call.1} parent=1 // pred_check
      _
    $region19: #{tpu_custom_call.1} parent=1 // pred_check_branch
      %21 = sbr.rel (0) target = $region21
    $region20: #{tpu_custom_call.1} parent=1 // pred_region
      _
    $region21: #{tpu_custom_call.1} parent=1 // pred_fallthru
      _
    // Predicated region
    $region22: #{tpu_custom_call.1} parent=1 // pred_check
      _
    $region23: #{tpu_custom_call.1} parent=1 // pred_check_branch
      %23 = sbr.rel (0) target = $region25
    $region24: #{tpu_custom_call.1} parent=1 // pred_region
      _
    $region25: #{tpu_custom_call.1} parent=1 // pred_fallthru
      _
    %v25 = vld [vmem:[%s0] sm:$0x3]
    %v26 = vld [vmem:[%s1] sm:$0xff]
    %v27 = vld [vmem:[%s1 + $0x8] sm:$0xff]
    %v28 = vld [vmem:[%s1 + $0x10] sm:$0xff]
    %v29 = vld [vmem:[%s1 + $0x18] sm:$0xff]
    %v30 = vld [vmem:[%s1 + $0x20] sm:$0xff]
    %v31 = vld [vmem:[%s1 + $0x28] sm:$0xff]
    %v32 = vld [vmem:[%s1 + $0x30] sm:$0xff]
    %v33 = vld [vmem:[%s1 + $0x38] sm:$0xff]
    %v34 = vld [vmem:[%s1 + $0x40] sm:$0xff]
    %v35 = vld [vmem:[%s1 + $0x48] sm:$0xff]
    %v36 = vld [vmem:[%s1 + $0x50] sm:$0xff]
    %v37 = vld [vmem:[%s1 + $0x58] sm:$0xff]
    %v38 = vld [vmem:[%s1 + $0x60] sm:$0xff]
    %v39 = vld [vmem:[%s1 + $0x68] sm:$0xff]
    %v40 = vld [vmem:[%s1 + $0x70] sm:$0xff]
    %v41 = vld [vmem:[%s1 + $0x78] sm:$0xff]
    %43 = vset.pattern.permute.xlu0 0
    %44 = vperm.xlu0 %43, %v26
    %v45 = vpop.permute.xlu0 %44
    %48 = vset.pattern.permute.xlu0 0
    %49 = vperm.xlu0 %48, %v27
    %v50 = vpop.permute.xlu0 %49
    %53 = vset.pattern.permute.xlu0 0
    %54 = vperm.xlu0 %53, %v28
    %v55 = vpop.permute.xlu0 %54
    %58 = vset.pattern.permute.xlu0 0
    %59 = vperm.xlu0 %58, %v29
    %v60 = vpop.permute.xlu0 %59
    %63 = vset.pattern.permute.xlu0 0
    %64 = vperm.xlu0 %63, %v30
    %v65 = vpop.permute.xlu0 %64
    %68 = vset.pattern.permute.xlu0 0
    %69 = vperm.xlu0 %68, %v31
    %v70 = vpop.permute.xlu0 %69
    %73 = vset.pattern.permute.xlu0 0
    %74 = vperm.xlu0 %73, %v32
    %v75 = vpop.permute.xlu0 %74
    %78 = vset.pattern.permute.xlu0 0
    %79 = vperm.xlu0 %78, %v33
    %v80 = vpop.permute.xlu0 %79
    %83 = vset.pattern.permute.xlu0 0
    %84 = vperm.xlu0 %83, %v34
    %v85 = vpop.permute.xlu0 %84
    %88 = vset.pattern.permute.xlu0 0
    %89 = vperm.xlu0 %88, %v35
    %v90 = vpop.permute.xlu0 %89
    %93 = vset.pattern.permute.xlu0 0
    %94 = vperm.xlu0 %93, %v36
    %v95 = vpop.permute.xlu0 %94
    %98 = vset.pattern.permute.xlu0 0
    %99 = vperm.xlu0 %98, %v37
    %v100 = vpop.permute.xlu0 %99
    %103 = vset.pattern.permute.xlu0 0
    %104 = vperm.xlu0 %103, %v38
    %v105 = vpop.permute.xlu0 %104
    %108 = vset.pattern.permute.xlu0 0
    %109 = vperm.xlu0 %108, %v39
    %v110 = vpop.permute.xlu0 %109
    %113 = vset.pattern.permute.xlu0 0
    %114 = vperm.xlu0 %113, %v40
    %v115 = vpop.permute.xlu0 %114
    %118 = vset.pattern.permute.xlu0 0
    %119 = vperm.xlu0 %118, %v41
    %v120 = vpop.permute.xlu0 %119
    %v122 = vlaneseq
    %v123 = vshrl.u32 %v122, 7
    %v124 = vsub.s32 0, %v123
    %v125 = vrot.slane %v25, %v124
    %v126 = vmul.f32 %v45, %v125
    %v127 = vmul.f32 %v50, %v125
    %v128 = vmul.f32 %v55, %v125
    %v129 = vmul.f32 %v60, %v125
    %v130 = vmul.f32 %v65, %v125
    %v131 = vmul.f32 %v70, %v125
    %v132 = vmul.f32 %v75, %v125
    %v133 = vmul.f32 %v80, %v125
    %v134 = vmul.f32 %v85, %v125
    %v135 = vmul.f32 %v90, %v125
    %v136 = vmul.f32 %v95, %v125
    %v137 = vmul.f32 %v100, %v125
    %v138 = vmul.f32 %v105, %v125
    %v139 = vmul.f32 %v110, %v125
    %v140 = vmul.f32 %v115, %v125
    %v141 = vmul.f32 %v120, %v125
    %142 = vset.pattern.permute.xlu0 1
    %143 = vperm.xlu0 %142, %v26
    %v144 = vpop.permute.xlu0 %143
    %146 = vset.pattern.permute.xlu0 1
    %147 = vperm.xlu0 %146, %v27
    %v148 = vpop.permute.xlu0 %147
    %150 = vset.pattern.permute.xlu0 1
    %151 = vperm.xlu0 %150, %v28
    %v152 = vpop.permute.xlu0 %151
    %154 = vset.pattern.permute.xlu0 1
    %155 = vperm.xlu0 %154, %v29
    %v156 = vpop.permute.xlu0 %155
    %158 = vset.pattern.permute.xlu0 1
    %159 = vperm.xlu0 %158, %v30
    %v160 = vpop.permute.xlu0 %159
    %162 = vset.pattern.permute.xlu0 1
    %163 = vperm.xlu0 %162, %v31
    %v164 = vpop.permute.xlu0 %163
    %166 = vset.pattern.permute.xlu0 1
    %167 = vperm.xlu0 %166, %v32
    %v168 = vpop.permute.xlu0 %167
    %170 = vset.pattern.permute.xlu0 1
    %171 = vperm.xlu0 %170, %v33
    %v172 = vpop.permute.xlu0 %171
    %174 = vset.pattern.permute.xlu0 1
    %175 = vperm.xlu0 %174, %v34
    %v176 = vpop.permute.xlu0 %175
    %178 = vset.pattern.permute.xlu0 1
    %179 = vperm.xlu0 %178, %v35
    %v180 = vpop.permute.xlu0 %179
    %182 = vset.pattern.permute.xlu0 1
    %183 = vperm.xlu0 %182, %v36
    %v184 = vpop.permute.xlu0 %183
    %186 = vset.pattern.permute.xlu0 1
    %187 = vperm.xlu0 %186, %v37
    %v188 = vpop.permute.xlu0 %187
    %190 = vset.pattern.permute.xlu0 1
    %191 = vperm.xlu0 %190, %v38
    %v192 = vpop.permute.xlu0 %191
    %194 = vset.pattern.permute.xlu0 1
    %195 = vperm.xlu0 %194, %v39
    %v196 = vpop.permute.xlu0 %195
    %198 = vset.pattern.permute.xlu0 1
    %199 = vperm.xlu0 %198, %v40
    %v200 = vpop.permute.xlu0 %199
    %202 = vset.pattern.permute.xlu0 1
    %203 = vperm.xlu0 %202, %v41
    %v204 = vpop.permute.xlu0 %203
    %v206 = vlaneseq
    %v207 = vshrl.u32 %v206, 7
    %v208 = vsub.s32 1, %v207
    %v209 = vrot.slane %v25, %v208
    %v210 = vmul.f32 %v144, %v209
    %v211 = vmul.f32 %v148, %v209
    %v212 = vmul.f32 %v152, %v209
    %v213 = vmul.f32 %v156, %v209
    %v214 = vmul.f32 %v160, %v209
    %v215 = vmul.f32 %v164, %v209
    %v216 = vmul.f32 %v168, %v209
    %v217 = vmul.f32 %v172, %v209
    %v218 = vmul.f32 %v176, %v209
    %v219 = vmul.f32 %v180, %v209
    %v220 = vmul.f32 %v184, %v209
    %v221 = vmul.f32 %v188, %v209
    %v222 = vmul.f32 %v192, %v209
    %v223 = vmul.f32 %v196, %v209
    %v224 = vmul.f32 %v200, %v209
    %v225 = vmul.f32 %v204, %v209
    %v226 = vadd.f32 %v126, %v210
    %v227 = vadd.f32 %v127, %v211
    %v228 = vadd.f32 %v128, %v212
    %v229 = vadd.f32 %v129, %v213
    %v230 = vadd.f32 %v130, %v214
    %v231 = vadd.f32 %v131, %v215
    %v232 = vadd.f32 %v132, %v216
    %v233 = vadd.f32 %v133, %v217
    %v234 = vadd.f32 %v134, %v218
    %v235 = vadd.f32 %v135, %v219
    %v236 = vadd.f32 %v136, %v220
    %v237 = vadd.f32 %v137, %v221
    %v238 = vadd.f32 %v138, %v222
    %v239 = vadd.f32 %v139, %v223
    %v240 = vadd.f32 %v140, %v224
    %v241 = vadd.f32 %v141, %v225
    %v242 = vld [vmem:[%s2] sm:$0xff]
    %v243 = vld [vmem:[%s2 + $0x8] sm:$0xff]
    %v244 = vld [vmem:[%s2 + $0x10] sm:$0xff]
    %v245 = vld [vmem:[%s2 + $0x18] sm:$0xff]
    %v246 = vld [vmem:[%s2 + $0x20] sm:$0xff]
    %v247 = vld [vmem:[%s2 + $0x28] sm:$0xff]
    %v248 = vld [vmem:[%s2 + $0x30] sm:$0xff]
    %v249 = vld [vmem:[%s2 + $0x38] sm:$0xff]
    %v250 = vld [vmem:[%s2 + $0x40] sm:$0xff]
    %v251 = vld [vmem:[%s2 + $0x48] sm:$0xff]
    %v252 = vld [vmem:[%s2 + $0x50] sm:$0xff]
    %v253 = vld [vmem:[%s2 + $0x58] sm:$0xff]
    %v254 = vld [vmem:[%s2 + $0x60] sm:$0xff]
    %v255 = vld [vmem:[%s2 + $0x68] sm:$0xff]
    %v256 = vld [vmem:[%s2 + $0x70] sm:$0xff]
    %v257 = vld [vmem:[%s2 + $0x78] sm:$0xff]
    %259 = vset.pattern.permute.xlu0 0
    %260 = vperm.xlu0 %259, %v242
    %v261 = vpop.permute.xlu0 %260
    %264 = vset.pattern.permute.xlu0 0
    %265 = vperm.xlu0 %264, %v243
    %v266 = vpop.permute.xlu0 %265
    %269 = vset.pattern.permute.xlu0 0
    %270 = vperm.xlu0 %269, %v244
    %v271 = vpop.permute.xlu0 %270
    %274 = vset.pattern.permute.xlu0 0
    %275 = vperm.xlu0 %274, %v245
    %v276 = vpop.permute.xlu0 %275
    %279 = vset.pattern.permute.xlu0 0
    %280 = vperm.xlu0 %279, %v246
    %v281 = vpop.permute.xlu0 %280
    %284 = vset.pattern.permute.xlu0 0
    %285 = vperm.xlu0 %284, %v247
    %v286 = vpop.permute.xlu0 %285
    %289 = vset.pattern.permute.xlu0 0
    %290 = vperm.xlu0 %289, %v248
    %v291 = vpop.permute.xlu0 %290
    %294 = vset.pattern.permute.xlu0 0
    %295 = vperm.xlu0 %294, %v249
    %v296 = vpop.permute.xlu0 %295
    %299 = vset.pattern.permute.xlu0 0
    %300 = vperm.xlu0 %299, %v250
    %v301 = vpop.permute.xlu0 %300
    %304 = vset.pattern.permute.xlu0 0
    %305 = vperm.xlu0 %304, %v251
    %v306 = vpop.permute.xlu0 %305
    %309 = vset.pattern.permute.xlu0 0
    %310 = vperm.xlu0 %309, %v252
    %v311 = vpop.permute.xlu0 %310
    %314 = vset.pattern.permute.xlu0 0
    %315 = vperm.xlu0 %314, %v253
    %v316 = vpop.permute.xlu0 %315
    %319 = vset.pattern.permute.xlu0 0
    %320 = vperm.xlu0 %319, %v254
    %v321 = vpop.permute.xlu0 %320
    %324 = vset.pattern.permute.xlu0 0
    %325 = vperm.xlu0 %324, %v255
    %v326 = vpop.permute.xlu0 %325
    %329 = vset.pattern.permute.xlu0 0
    %330 = vperm.xlu0 %329, %v256
    %v331 = vpop.permute.xlu0 %330
    %334 = vset.pattern.permute.xlu0 0
    %335 = vperm.xlu0 %334, %v257
    %v336 = vpop.permute.xlu0 %335
    %v338 = vadd.f32 %v226, %v261
    %v339 = vadd.f32 %v227, %v266
    %v340 = vadd.f32 %v228, %v271
    %v341 = vadd.f32 %v229, %v276
    %v342 = vadd.f32 %v230, %v281
    %v343 = vadd.f32 %v231, %v286
    %v344 = vadd.f32 %v232, %v291
    %v345 = vadd.f32 %v233, %v296
    %v346 = vadd.f32 %v234, %v301
    %v347 = vadd.f32 %v235, %v306
    %v348 = vadd.f32 %v236, %v311
    %v349 = vadd.f32 %v237, %v316
    %v350 = vadd.f32 %v238, %v321
    %v351 = vadd.f32 %v239, %v326
    %v352 = vadd.f32 %v240, %v331
    %v353 = vadd.f32 %v241, %v336
    %vm354 = vcmp.gt.f32.partialorder %v338, 0.0
    %vm355 = vcmp.gt.f32.partialorder %v339, 0.0
    %vm356 = vcmp.gt.f32.partialorder %v340, 0.0
    %vm357 = vcmp.gt.f32.partialorder %v341, 0.0
    %vm358 = vcmp.gt.f32.partialorder %v342, 0.0
    %vm359 = vcmp.gt.f32.partialorder %v343, 0.0
    %vm360 = vcmp.gt.f32.partialorder %v344, 0.0
    %vm361 = vcmp.gt.f32.partialorder %v345, 0.0
    %vm362 = vcmp.gt.f32.partialorder %v346, 0.0
    %vm363 = vcmp.gt.f32.partialorder %v347, 0.0
    %vm364 = vcmp.gt.f32.partialorder %v348, 0.0
    %vm365 = vcmp.gt.f32.partialorder %v349, 0.0
    %vm366 = vcmp.gt.f32.partialorder %v350, 0.0
    %vm367 = vcmp.gt.f32.partialorder %v351, 0.0
    %vm368 = vcmp.gt.f32.partialorder %v352, 0.0
    %vm369 = vcmp.gt.f32.partialorder %v353, 0.0
    %v370 = vmul.f32 %v338, 0.01
    %v371 = vmul.f32 %v339, 0.01
    %v372 = vmul.f32 %v340, 0.01
    %v373 = vmul.f32 %v341, 0.01
    %v374 = vmul.f32 %v342, 0.01
    %v375 = vmul.f32 %v343, 0.01
    %v376 = vmul.f32 %v344, 0.01
    %v377 = vmul.f32 %v345, 0.01
    %v378 = vmul.f32 %v346, 0.01
    %v379 = vmul.f32 %v347, 0.01
    %v380 = vmul.f32 %v348, 0.01
    %v381 = vmul.f32 %v349, 0.01
    %v382 = vmul.f32 %v350, 0.01
    %v383 = vmul.f32 %v351, 0.01
    %v384 = vmul.f32 %v352, 0.01
    %v385 = vmul.f32 %v353, 0.01
    %v386 = vsel %vm354, %v338, %v370
    %v387 = vsel %vm355, %v339, %v371
    %v388 = vsel %vm356, %v340, %v372
    %v389 = vsel %vm357, %v341, %v373
    %v390 = vsel %vm358, %v342, %v374
    %v391 = vsel %vm359, %v343, %v375
    %v392 = vsel %vm360, %v344, %v376
    %v393 = vsel %vm361, %v345, %v377
    %v394 = vsel %vm362, %v346, %v378
    %v395 = vsel %vm363, %v347, %v379
    %v396 = vsel %vm364, %v348, %v380
    %v397 = vsel %vm365, %v349, %v381
    %v398 = vsel %vm366, %v350, %v382
    %v399 = vsel %vm367, %v351, %v383
    %v400 = vsel %vm368, %v352, %v384
    %v401 = vsel %vm369, %v353, %v385
    %v402 = vld [vmem:[%s3] sm:$0xf]
    %v403 = vld [vmem:[%s3 + $0x4] sm:$0xf]
    %v404 = vld [vmem:[%s3 + $0x8] sm:$0xf]
    %v405 = vld [vmem:[%s3 + $0xc] sm:$0xf]
    %v406 = vld [vmem:[%s3 + $0x10] sm:$0xf]
    %v407 = vld [vmem:[%s3 + $0x14] sm:$0xf]
    %v408 = vld [vmem:[%s3 + $0x18] sm:$0xf]
    %v409 = vld [vmem:[%s3 + $0x1c] sm:$0xf]
    %v410 = vld [vmem:[%s3 + $0x20] sm:$0xf]
    %v411 = vld [vmem:[%s3 + $0x24] sm:$0xf]
    %v412 = vld [vmem:[%s3 + $0x28] sm:$0xf]
    %v413 = vld [vmem:[%s3 + $0x2c] sm:$0xf]
    %v414 = vld [vmem:[%s3 + $0x30] sm:$0xf]
    %v415 = vld [vmem:[%s3 + $0x34] sm:$0xf]
    %v416 = vld [vmem:[%s3 + $0x38] sm:$0xf]
    %v417 = vld [vmem:[%s3 + $0x3c] sm:$0xf]
    %v418 = vpack.c.bf16 %v387, %v386
    %v419 = vpack.c.bf16 %v389, %v388
    %v420 = vpack.c.bf16 %v391, %v390
    %v421 = vpack.c.bf16 %v393, %v392
    %v422 = vpack.c.bf16 %v395, %v394
    %v423 = vpack.c.bf16 %v397, %v396
    %v424 = vpack.c.bf16 %v399, %v398
    %v425 = vpack.c.bf16 %v401, %v400
    %v426 = vld [vmem:[%s4] sm:$0xff]
    %v427 = vld [vmem:[%s4 + $0x8] sm:$0xff]
    %v428 = vld [vmem:[%s4 + $0x10] sm:$0xff]
    %v429 = vld [vmem:[%s4 + $0x18] sm:$0xff]
    %v430 = vld [vmem:[%s4 + $0x20] sm:$0xff]
    %v431 = vld [vmem:[%s4 + $0x28] sm:$0xff]
    %v432 = vld [vmem:[%s4 + $0x30] sm:$0xff]
    %v433 = vld [vmem:[%s4 + $0x38] sm:$0xff]
    %v434 = vld [vmem:[%s4 + $0x40] sm:$0xff]
    %v435 = vld [vmem:[%s4 + $0x48] sm:$0xff]
    %v436 = vld [vmem:[%s4 + $0x50] sm:$0xff]
    %v437 = vld [vmem:[%s4 + $0x58] sm:$0xff]
    %v438 = vld [vmem:[%s4 + $0x60] sm:$0xff]
    %v439 = vld [vmem:[%s4 + $0x68] sm:$0xff]
    %v440 = vld [vmem:[%s4 + $0x70] sm:$0xff]
    %v441 = vld [vmem:[%s4 + $0x78] sm:$0xff]
    %443 = vset.pattern.permute.xlu0 0
    %444 = vperm.xlu0 %443, %v426
    %v445 = vpop.permute.xlu0 %444
    %448 = vset.pattern.permute.xlu0 0
    %449 = vperm.xlu0 %448, %v427
    %v450 = vpop.permute.xlu0 %449
    %453 = vset.pattern.permute.xlu0 0
    %454 = vperm.xlu0 %453, %v428
    %v455 = vpop.permute.xlu0 %454
    %458 = vset.pattern.permute.xlu0 0
    %459 = vperm.xlu0 %458, %v429
    %v460 = vpop.permute.xlu0 %459
    %463 = vset.pattern.permute.xlu0 0
    %464 = vperm.xlu0 %463, %v430
    %v465 = vpop.permute.xlu0 %464
    %468 = vset.pattern.permute.xlu0 0
    %469 = vperm.xlu0 %468, %v431
    %v470 = vpop.permute.xlu0 %469
    %473 = vset.pattern.permute.xlu0 0
    %474 = vperm.xlu0 %473, %v432
    %v475 = vpop.permute.xlu0 %474
    %478 = vset.pattern.permute.xlu0 0
    %479 = vperm.xlu0 %478, %v433
    %v480 = vpop.permute.xlu0 %479
    %483 = vset.pattern.permute.xlu0 0
    %484 = vperm.xlu0 %483, %v434
    %v485 = vpop.permute.xlu0 %484
    %488 = vset.pattern.permute.xlu0 0
    %489 = vperm.xlu0 %488, %v435
    %v490 = vpop.permute.xlu0 %489
    %493 = vset.pattern.permute.xlu0 0
    %494 = vperm.xlu0 %493, %v436
    %v495 = vpop.permute.xlu0 %494
    %498 = vset.pattern.permute.xlu0 0
    %499 = vperm.xlu0 %498, %v437
    %v500 = vpop.permute.xlu0 %499
    %503 = vset.pattern.permute.xlu0 0
    %504 = vperm.xlu0 %503, %v438
    %v505 = vpop.permute.xlu0 %504
    %508 = vset.pattern.permute.xlu0 0
    %509 = vperm.xlu0 %508, %v439
    %v510 = vpop.permute.xlu0 %509
    %513 = vset.pattern.permute.xlu0 0
    %514 = vperm.xlu0 %513, %v440
    %v515 = vpop.permute.xlu0 %514
    %518 = vset.pattern.permute.xlu0 0
    %519 = vperm.xlu0 %518, %v441
    %v520 = vpop.permute.xlu0 %519
    %v538 = vunpack.c.l.b16 %v402
    %v539 = vunpack.c.l.b16 %v403
    %v540 = vunpack.c.l.b16 %v404
    %v541 = vunpack.c.l.b16 %v405
    %v542 = vunpack.c.l.b16 %v406
    %v543 = vunpack.c.l.b16 %v407
    %v544 = vunpack.c.l.b16 %v408
    %v545 = vunpack.c.l.b16 %v409
    %v546 = vunpack.c.l.b16 %v410
    %v547 = vunpack.c.l.b16 %v411
    %v548 = vunpack.c.l.b16 %v412
    %v549 = vunpack.c.l.b16 %v413
    %v550 = vunpack.c.l.b16 %v414
    %v551 = vunpack.c.l.b16 %v415
    %v552 = vunpack.c.l.b16 %v416
    %v553 = vunpack.c.l.b16 %v417
    %v554 = vpack.c.b16 %v539, %v538
    %v555 = vpack.c.b16 %v541, %v540
    %v556 = vpack.c.b16 %v543, %v542
    %v557 = vpack.c.b16 %v545, %v544
    %v558 = vpack.c.b16 %v547, %v546
    %v559 = vpack.c.b16 %v549, %v548
    %v560 = vpack.c.b16 %v551, %v550
    %v561 = vpack.c.b16 %v553, %v552
    %570 = vmatprep.subr.bf16.mxu0 0
    %571 = vmatpush1.bf16.msra.mxu0 %v418
    %572 = vmatprep.subr.bf16.mxu0 0
    %573 = vmatpush1.bf16.msra.mxu0 %v419
    %574 = vmatprep.subr.bf16.mxu0 0
    %575 = vmatpush1.bf16.msra.mxu0 %v420
    %576 = vmatprep.subr.bf16.mxu0 0
    %577 = vmatpush1.bf16.msra.mxu0 %v421
    %578 = vmatprep.subr.bf16.mxu0 0
    %579 = vmatpush1.bf16.msra.mxu0 %v422
    %580 = vmatprep.subr.bf16.mxu0 0
    %581 = vmatpush1.bf16.msra.mxu0 %v423
    %582 = vmatprep.subr.bf16.mxu0 0
    %583 = vmatpush1.bf16.msra.mxu0 %v424
    %584 = vmatprep.subr.bf16.mxu0 0
    %585 = vmatpush1.bf16.msra.mxu0 %v425
    %586 = vmatprep.subr.bf16.mxu0 0
    %587 = vmatpush1.bf16.msra.mxu0 0
    %588 = vmatprep.subr.bf16.mxu0 0
    %589 = vmatpush1.bf16.msra.mxu0 0
    %590 = vmatprep.subr.bf16.mxu0 0
    %591 = vmatpush1.bf16.msra.mxu0 0
    %592 = vmatprep.subr.bf16.mxu0 0
    %593 = vmatpush1.bf16.msra.mxu0 0
    %594 = vmatprep.subr.bf16.mxu0 0
    %595 = vmatpush1.bf16.msra.mxu0 0
    %596 = vmatprep.subr.bf16.mxu0 0
    %597 = vmatpush1.bf16.msra.mxu0 0
    %598 = vmatprep.subr.bf16.mxu0 0
    %599 = vmatpush1.bf16.msra.mxu0 0
    %600 = vmatprep.subr.bf16.mxu0 0
    %601 = vmatpush1.bf16.msra.mxu0 0
    %602 = vmatprep.mubr.bf16.mxu0 0
    %603 = vmatmul.mubr.bf16.gmra.mrb[0].mxu0 %v554
    %v604 = vpop.f32.mrb[0].mxu0
    %v605 = vadd.f32 %v445, %v604
    %v606 = vpop.f32.mrb[0].mxu0
    %v607 = vpop.f32.mrb[0].mxu0
    %v608 = vadd.f32 %v450, %v607
    %v609 = vpop.f32.mrb[0].mxu0
    %610 = vmatprep.mubr.bf16.mxu0 0
    %611 = vmatmul.mubr.bf16.gmra.mrb[0].mxu0 %v555
    %v612 = vpop.f32.mrb[0].mxu0
    %v613 = vadd.f32 %v455, %v612
    %v614 = vpop.f32.mrb[0].mxu0
    %v615 = vpop.f32.mrb[0].mxu0
    %v616 = vadd.f32 %v460, %v615
    %v617 = vpop.f32.mrb[0].mxu0
    %618 = vmatprep.mubr.bf16.mxu0 0
    %619 = vmatmul.mubr.bf16.gmra.mrb[0].mxu0 %v556
    %v620 = vpop.f32.mrb[0].mxu0
    %v621 = vadd.f32 %v465, %v620
    %v622 = vpop.f32.mrb[0].mxu0
    %v623 = vpop.f32.mrb[0].mxu0
    %v624 = vadd.f32 %v470, %v623
    %v625 = vpop.f32.mrb[0].mxu0
    %626 = vmatprep.mubr.bf16.mxu0 0
    %627 = vmatmul.mubr.bf16.gmra.mrb[0].mxu0 %v557
    %v628 = vpop.f32.mrb[0].mxu0
    %v629 = vadd.f32 %v475, %v628
    %v630 = vpop.f32.mrb[0].mxu0
    %v631 = vpop.f32.mrb[0].mxu0
    %v632 = vadd.f32 %v480, %v631
    %v633 = vpop.f32.mrb[0].mxu0
    %634 = vmatprep.mubr.bf16.mxu0 0
    %635 = vmatmul.mubr.bf16.gmra.mrb[0].mxu0 %v558
    %v636 = vpop.f32.mrb[0].mxu0
    %v637 = vadd.f32 %v485, %v636
    %v638 = vpop.f32.mrb[0].mxu0
    %v639 = vpop.f32.mrb[0].mxu0
    %v640 = vadd.f32 %v490, %v639
    %v641 = vpop.f32.mrb[0].mxu0
    %642 = vmatprep.mubr.bf16.mxu0 0
    %643 = vmatmul.mubr.bf16.gmra.mrb[0].mxu0 %v559
    %v644 = vpop.f32.mrb[0].mxu0
    %v645 = vadd.f32 %v495, %v644
    %v646 = vpop.f32.mrb[0].mxu0
    %v647 = vpop.f32.mrb[0].mxu0
    %v648 = vadd.f32 %v500, %v647
    %v649 = vpop.f32.mrb[0].mxu0
    %650 = vmatprep.mubr.bf16.mxu0 0
    %651 = vmatmul.mubr.bf16.gmra.mrb[0].mxu0 %v560
    %v652 = vpop.f32.mrb[0].mxu0
    %v653 = vadd.f32 %v505, %v652
    %v654 = vpop.f32.mrb[0].mxu0
    %v655 = vpop.f32.mrb[0].mxu0
    %v656 = vadd.f32 %v510, %v655
    %v657 = vpop.f32.mrb[0].mxu0
    %658 = vmatprep.mubr.bf16.mxu0 0
    %659 = vmatmul.mubr.bf16.gmra.mrb[0].mxu0 %v561
    %v660 = vpop.f32.mrb[0].mxu0
    %v661 = vadd.f32 %v515, %v660
    %v662 = vpop.f32.mrb[0].mxu0
    %v663 = vpop.f32.mrb[0].mxu0
    %v664 = vadd.f32 %v520, %v663
    %v665 = vpop.f32.mrb[0].mxu0
    %666 = vdwg.mxu0
    %vm667 = vcmp.gt.f32.partialorder %v605, 0.0
    %vm668 = vcmp.gt.f32.partialorder %v608, 0.0
    %vm669 = vcmp.gt.f32.partialorder %v613, 0.0
    %vm670 = vcmp.gt.f32.partialorder %v616, 0.0
    %vm671 = vcmp.gt.f32.partialorder %v621, 0.0
    %vm672 = vcmp.gt.f32.partialorder %v624, 0.0
    %vm673 = vcmp.gt.f32.partialorder %v629, 0.0
    %vm674 = vcmp.gt.f32.partialorder %v632, 0.0
    %vm675 = vcmp.gt.f32.partialorder %v637, 0.0
    %vm676 = vcmp.gt.f32.partialorder %v640, 0.0
    %vm677 = vcmp.gt.f32.partialorder %v645, 0.0
    %vm678 = vcmp.gt.f32.partialorder %v648, 0.0
    %vm679 = vcmp.gt.f32.partialorder %v653, 0.0
    %vm680 = vcmp.gt.f32.partialorder %v656, 0.0
    %vm681 = vcmp.gt.f32.partialorder %v661, 0.0
    %vm682 = vcmp.gt.f32.partialorder %v664, 0.0
    %v683 = vmul.f32 %v605, 0.01
    %v684 = vmul.f32 %v608, 0.01
    %v685 = vmul.f32 %v613, 0.01
    %v686 = vmul.f32 %v616, 0.01
    %v687 = vmul.f32 %v621, 0.01
    %v688 = vmul.f32 %v624, 0.01
    %v689 = vmul.f32 %v629, 0.01
    %v690 = vmul.f32 %v632, 0.01
    %v691 = vmul.f32 %v637, 0.01
    %v692 = vmul.f32 %v640, 0.01
    %v693 = vmul.f32 %v645, 0.01
    %v694 = vmul.f32 %v648, 0.01
    %v695 = vmul.f32 %v653, 0.01
    %v696 = vmul.f32 %v656, 0.01
    %v697 = vmul.f32 %v661, 0.01
    %v698 = vmul.f32 %v664, 0.01
    %v699 = vsel %vm667, %v605, %v683
    %v700 = vsel %vm668, %v608, %v684
    %v701 = vsel %vm669, %v613, %v685
    %v702 = vsel %vm670, %v616, %v686
    %v703 = vsel %vm671, %v621, %v687
    %v704 = vsel %vm672, %v624, %v688
    %v705 = vsel %vm673, %v629, %v689
    %v706 = vsel %vm674, %v632, %v690
    %v707 = vsel %vm675, %v637, %v691
    %v708 = vsel %vm676, %v640, %v692
    %v709 = vsel %vm677, %v645, %v693
    %v710 = vsel %vm678, %v648, %v694
    %v711 = vsel %vm679, %v653, %v695
    %v712 = vsel %vm680, %v656, %v696
    %v713 = vsel %vm681, %v661, %v697
    %v714 = vsel %vm682, %v664, %v698
    %v715 = vld [vmem:[%s5] sm:$0x3]
    %v716 = vpack.c.bf16 %v700, %v699
    %v717 = vpack.c.bf16 %v702, %v701
    %v718 = vpack.c.bf16 %v704, %v703
    %v719 = vpack.c.bf16 %v706, %v705
    %v720 = vpack.c.bf16 %v708, %v707
    %v721 = vpack.c.bf16 %v710, %v709
    %v722 = vpack.c.bf16 %v712, %v711
    %v723 = vpack.c.bf16 %v714, %v713
    %724 = vmatprep.subr.bf16.mxu0 0
    %725 = vmatpush1.bf16.msra.mxu0 %v716
    %726 = vmatprep.subr.bf16.mxu0 0
    %727 = vmatpush1.bf16.msra.mxu0 %v717
    %728 = vmatprep.subr.bf16.mxu0 0
    %729 = vmatpush1.bf16.msra.mxu0 %v718
    %730 = vmatprep.subr.bf16.mxu0 0
    %731 = vmatpush1.bf16.msra.mxu0 %v719
    %732 = vmatprep.subr.bf16.mxu0 0
    %733 = vmatpush1.bf16.msra.mxu0 %v720
    %734 = vmatprep.subr.bf16.mxu0 0
    %735 = vmatpush1.bf16.msra.mxu0 %v721
    %736 = vmatprep.subr.bf16.mxu0 0
    %737 = vmatpush1.bf16.msra.mxu0 %v722
    %738 = vmatprep.subr.bf16.mxu0 0
    %739 = vmatpush1.bf16.msra.mxu0 %v723
    %740 = vmatprep.subr.bf16.mxu0 0
    %741 = vmatpush1.bf16.msra.mxu0 0
    %742 = vmatprep.subr.bf16.mxu0 0
    %743 = vmatpush1.bf16.msra.mxu0 0
    %744 = vmatprep.subr.bf16.mxu0 0
    %745 = vmatpush1.bf16.msra.mxu0 0
    %746 = vmatprep.subr.bf16.mxu0 0
    %747 = vmatpush1.bf16.msra.mxu0 0
    %748 = vmatprep.subr.bf16.mxu0 0
    %749 = vmatpush1.bf16.msra.mxu0 0
    %750 = vmatprep.subr.bf16.mxu0 0
    %751 = vmatpush1.bf16.msra.mxu0 0
    %752 = vmatprep.subr.bf16.mxu0 0
    %753 = vmatpush1.bf16.msra.mxu0 0
    %754 = vmatprep.subr.bf16.mxu0 0
    %755 = vmatpush1.bf16.msra.mxu0 0
    %756 = vmatprep.mubr.bf16.mxu0 0
    %757 = vmatmul.mubr.bf16.gmra.mrb[0].mxu0 %v715
    %v758 = vpop.f32.mrb[0].mxu0
    %v759 = vadd.f32 0.0, %v758
    %v760 = vpop.f32.mrb[0].mxu0
    %v761 = vpop.f32.mrb[0].mxu0
    %v762 = vpop.f32.mrb[0].mxu0
    %763 = vdwg.mxu0
    %vm764 = vcmask 59392
    %v765 = vsel %vm764, %v759, -inf
    %v766 = vrot.slane %v765, 4
    %v767 = vmax.f32 %v765, %v766
    %v768 = vrot.slane %v767, 2
    %v769 = vmax.f32 %v767, %v768
    %v770 = vrot.slane %v769, 1
    %v771 = vmax.f32 %v769, %v770
    %v772 = vsub.f32 %v759, %v771
    %v773 = vmul.f32 %v772, 1.442695
    %v774 = vpow.pop %v773
    %v775 = vsel %vm764, %v774, 0.0
    %v776 = vrot.slane %v775, 4
    %v777 = vadd.f32 %v775, %v776
    %v778 = vrot.slane %v777, 2
    %v779 = vadd.f32 %v777, %v778
    %v780 = vrot.slane %v779, 1
    %v781 = vadd.f32 %v779, %v780
    %v782 = vrcp.pop %v781
    %v783 = vmul.f32 %v774, %v782
    %784 = vst.msk [vmem:[#allocation2] sm:$0x7] %vm764, %v783
    // Predicated region
    $region26: #{tpu_custom_call.1} parent=1 // pred_check
      _
    $region27: #{tpu_custom_call.1} parent=1 // pred_check_branch
      %786 = sbr.rel (0) target = $region29
    $region28: #{tpu_custom_call.1} parent=1 // pred_region
      %s788 = ssub.s32 64, 64
      %789 = vsyncadd [#allocation3], %s788
      %s791 = sshll.u32 [#allocation2], 4
      %s792 = int_to_ptr.vmem [resolvable:$true] %s791
      %794 = dma.vmem_to_hbm [thread:$0]  %s792, 64, %s6, [#allocation3]
    $region29: #{tpu_custom_call.1} parent=1 // pred_fallthru
      _
    // Predicated region
    $region30: #{tpu_custom_call.1} parent=1 // pred_check
      _
    $region31: #{tpu_custom_call.1} parent=1 // pred_check_branch
      %796 = sbr.rel (0) target = $region33
    $region32: #{tpu_custom_call.1} parent=1 // pred_region
      %797 = dma.done [#allocation3], 64
    $region33: #{tpu_custom_call.1} parent=1 // pred_fallthru
      _
    %798 = vsyncpa [#allocation3], 1

</llo_original>
